<compile_context>
chip_gen: v7x
topology: tpu7x:2x2x1
jax: 0.10.0
libtpu: 0.0.40
codegen_flags: <defaults>
</compile_context>

<pallas_src>
import jax
import jax.numpy as jnp
from jax.experimental import pallas as pl
from jax.experimental.pallas import tpu as pltpu  # noqa: F401  (TPU backend)


# ----------------------------- Pallas kernel -------------------------------

def fused_conv_kernel(a1_ref, mask_ref, w1_ref, b1_ref, w2_ref, o_ref):
    # a1:   (9, 1156)  im2col patches laid out on the conv2-padded 34x34 grid
    # mask: (1, 1156)  1.0 on the 32x32 interior, 0.0 on the padding border
    # w1:   (16, 9), b1: (16, 1), w2: (32, 16)
    # o:    (32, 1156) = sigmoid(conv2(zero_pad(sigmoid(conv1(x) + b1))))
    h = jnp.dot(w1_ref[...], a1_ref[...], preferred_element_type=jnp.float32)
    h = jax.nn.sigmoid(h + b1_ref[...]) * mask_ref[...]       # (16,1156), border -> 0
    o = jnp.dot(w2_ref[...], h, preferred_element_type=jnp.float32)
    o_ref[...] = jax.nn.sigmoid(o).astype(o_ref.dtype)        # border -> sigmoid(0)=0.5


def _full_spec(shape):
    # single-program kernel: one full-array block (no grid)
    return pl.BlockSpec(shape, lambda: (0,) * len(shape))


# ------------------------------ Model wrapper -------------------------------

def init_params(key):
    k1, k2, k3 = jax.random.split(key, 3)
    # conv1: (out_ch=16, in_ch=1, 3, 3) + bias (16,)
    w1 = jax.random.normal(k1, (16, 1, 3, 3), jnp.float32) * 0.1
    b1 = jax.random.normal(k2, (16,), jnp.float32) * 0.1
    # conv2: (out_ch=32, in_ch=16, 1, 1), no bias
    w2 = jax.random.normal(k3, (32, 16, 1, 1), jnp.float32) * 0.1
    return w1, b1, w2


def model_forward(x_nchw, w1, b1, w2):
    # x_nchw: (1, 1, 64, 64) float32
    N, C, H, W = x_nchw.shape
    assert N == 1 and C == 1
    Ho, Wo = (H + 2 - 3) // 2 + 1, (W + 2 - 3) // 2 + 1         # conv1 out: 32, 32
    Hp, Wp = Ho + 2, Wo + 2                                     # conv2 padded: 34, 34
    P = Hp * Wp                                                 # 1156 (lane-dense)

    # ---- im2col for conv1, tap-major (K=9 first), laid on the padded grid ----
    x2d = x_nchw[0, 0]                                          # (64, 64)
    xp = jnp.pad(x2d, ((1, 1), (1, 1)))                         # (66, 66)
    taps = [xp[dy:dy + 2 * Ho:2, dx:dx + 2 * Wo:2]
            for dy in range(3) for dx in range(3)]              # 9 x (32, 32)
    patches = jnp.stack(taps, axis=0)                           # (9, 32, 32)
    patches = jnp.pad(patches, ((0, 0), (1, 1), (1, 1)))        # (9, 34, 34)
    a1 = patches.reshape(9, P)                                  # (9, 1156)
    mask = jnp.pad(jnp.ones((Ho, Wo), jnp.float32),
                   ((1, 1), (1, 1))).reshape(1, P)              # (1, 1156)

    w1m = w1.reshape(16, 9)                                     # (oc, ic*kh*kw)
    b1m = b1.reshape(16, 1)
    w2m = w2.reshape(32, 16)

    out = pl.pallas_call(
        fused_conv_kernel,
        out_shape=jax.ShapeDtypeStruct((32, P), jnp.float32),
        in_specs=[_full_spec(a1.shape), _full_spec(mask.shape),
                  _full_spec(w1m.shape), _full_spec(b1m.shape),
                  _full_spec(w2m.shape)],
        out_specs=_full_spec((32, P)),
    )(a1, mask, w1m, b1m, w2m)

    # (32, 1156) is already contiguous NCHW data -> free reshape, no transpose
    return out.reshape(1, 32, Hp, Wp)


model_forward_jit = jax.jit(model_forward)


def reference_forward(x, w1, b1, w2):
    v1 = jax.lax.conv_general_dilated(
        x, w1, window_strides=(2, 2), padding=((1, 1), (1, 1)),
        dimension_numbers=("NCHW", "OIHW", "NCHW"))
    v2 = jax.nn.sigmoid(v1 + b1.reshape(1, -1, 1, 1))
    v3 = jax.lax.conv_general_dilated(
        v2, w2, window_strides=(1, 1), padding=((1, 1), (1, 1)),
        dimension_numbers=("NCHW", "OIHW", "NCHW"))
    return jax.nn.sigmoid(v3)


if __name__ == "__main__":
    key = jax.random.PRNGKey(0)
    kx, kp = jax.random.split(key)
    x1 = jax.random.normal(kx, (1, 1, 64, 64), jnp.float32)
    w1, b1, w2 = init_params(kp)

    out = jax.block_until_ready(model_forward_jit(x1, w1, b1, w2))
    assert out.shape == (1, 32, 34, 34), out.shape
    assert bool(jnp.all(jnp.isfinite(out)))

    ref = reference_forward(x1, w1, b1, w2)
    max_err = float(jnp.max(jnp.abs(out - ref)))
    assert bool(jnp.allclose(out, ref, atol=1e-2, rtol=1e-2)), max_err

    print("KERNEL_OK")
</pallas_src>

<mosaic_0001>
module attributes {stable_mosaic.version = 11 : i64} {
  func.func @fused_conv_kernel(%arg0: memref<9x1156xf32, #tpu.memory_space<vmem>>, %arg1: memref<1x1156xf32, #tpu.memory_space<vmem>>, %arg2: memref<16x9xf32, #tpu.memory_space<vmem>>, %arg3: memref<16x1xf32, #tpu.memory_space<vmem>>, %arg4: memref<32x16xf32, #tpu.memory_space<vmem>>, %arg5: memref<32x1156xf32, #tpu.memory_space<vmem>>) attributes {dimension_semantics = [], scalar_prefetch = 0 : i64, scratch_operands = 0 : i64, tpu.core_type = #tpu.core_type<tc>} {
    %c0 = arith.constant 0 : index
    %c0_0 = arith.constant 0 : index
    %0 = vector.load %arg2[%c0, %c0_0] : memref<16x9xf32, #tpu.memory_space<vmem>>, vector<16x9xf32>
    %c0_1 = arith.constant 0 : index
    %c0_2 = arith.constant 0 : index
    %1 = vector.load %arg0[%c0_1, %c0_2] : memref<9x1156xf32, #tpu.memory_space<vmem>>, vector<9x1156xf32>
    %cst = arith.constant dense<0.000000e+00> : vector<16x1156xf32>
    %2 = tpu.matmul %0, %1, %cst {dimension_numbers = #tpu.dot_dimension_numbers<[1], [0], [0], [1], [0, 0, 1, 1], [], []>} : vector<16x9xf32>, vector<9x1156xf32>, vector<16x1156xf32> -> vector<16x1156xf32>
    %c0_3 = arith.constant 0 : index
    %c0_4 = arith.constant 0 : index
    %3 = vector.load %arg3[%c0_3, %c0_4] : memref<16x1xf32, #tpu.memory_space<vmem>>, vector<16x1xf32>
    %4 = vector.broadcast %3 : vector<16x1xf32> to vector<16x1156xf32>
    %5 = arith.addf %2, %4 : vector<16x1156xf32>
    %6 = arith.negf %5 : vector<16x1156xf32>
    %7 = math.exp %6 : vector<16x1156xf32>
    %cst_5 = arith.constant 1.000000e+00 : f32
    %8 = vector.broadcast %cst_5 : f32 to vector<16x1156xf32>
    %9 = arith.addf %8, %7 : vector<16x1156xf32>
    %10 = arith.divf %8, %9 : vector<16x1156xf32>
    %c0_6 = arith.constant 0 : index
    %c0_7 = arith.constant 0 : index
    %11 = vector.load %arg1[%c0_6, %c0_7] : memref<1x1156xf32, #tpu.memory_space<vmem>>, vector<1x1156xf32>
    %12 = vector.broadcast %11 : vector<1x1156xf32> to vector<16x1156xf32>
    %13 = arith.mulf %10, %12 : vector<16x1156xf32>
    %c0_8 = arith.constant 0 : index
    %c0_9 = arith.constant 0 : index
    %14 = vector.load %arg4[%c0_8, %c0_9] : memref<32x16xf32, #tpu.memory_space<vmem>>, vector<32x16xf32>
    %cst_10 = arith.constant dense<0.000000e+00> : vector<32x1156xf32>
    %15 = tpu.matmul %14, %13, %cst_10 {dimension_numbers = #tpu.dot_dimension_numbers<[1], [0], [0], [1], [0, 0, 1, 1], [], []>} : vector<32x16xf32>, vector<16x1156xf32>, vector<32x1156xf32> -> vector<32x1156xf32>
    %16 = arith.negf %15 : vector<32x1156xf32>
    %17 = math.exp %16 : vector<32x1156xf32>
    %cst_11 = arith.constant 1.000000e+00 : f32
    %18 = vector.broadcast %cst_11 : f32 to vector<32x1156xf32>
    %19 = arith.addf %18, %17 : vector<32x1156xf32>
    %20 = arith.divf %18, %19 : vector<32x1156xf32>
    %c0_12 = arith.constant 0 : index
    %c0_13 = arith.constant 0 : index
    %21 = vector.load %arg5[%c0_12, %c0_13] : memref<32x1156xf32, #tpu.memory_space<vmem>>, vector<32x1156xf32>
    tpu.vector_store %arg5[%c0_12, %c0_13], %20 {strides = array<i32>} : memref<32x1156xf32, #tpu.memory_space<vmem>>, vector<32x1156xf32>,
    return
  }
}

</mosaic_0001>

<llo_original>
// kernel: model_forward.1
$region0: #{model_forward.1}
  #allocation0 [shape = 'u32[]', space=smem, size = 0x4, offset = 0x4, fixed_abs, tag = 'smem constant byte address 0x4 - core index']
  #allocation1 [shape = 'u32[144,128]{1,0:T(1,128)}', space=vmem, size = 0x12000, scoped, tag = 'internal scratch']
  %s0 = inlined_call_operand.vmem [shape: f32[9,1156], index: 0, kind: input, shape index: {}]
  %s1 = inlined_call_operand.vmem [shape: f32[1,1156], index: 1, kind: input, shape index: {}]
  %s2 = inlined_call_operand.vmem [shape: f32[16,9], index: 2, kind: input, shape index: {}]
  %s3 = inlined_call_operand.vmem [shape: f32[16,1], index: 3, kind: input, shape index: {}]
  %s4 = inlined_call_operand.vmem [shape: f32[32,16], index: 4, kind: input, shape index: {}]
  %s5 = inlined_call_operand.vmem [shape: f32[32,1156], index: 5, kind: output, shape index: {}]
  %s6 = sld [smem:[#allocation0]]
  $region30: #{model_forward.1} parent=0
    _
  %s8 = ssub.s32 1, %s6
  %s9 = scalar_select 0, %s8, %s6
  // Predicated region
  $region2: #{model_forward.1} parent=0 // pred_check
    _
  $region3: #{model_forward.1} parent=0 // pred_check_branch
    %11 = sbr.rel (0) target = $region5
  $region4: #{model_forward.1} parent=0 // pred_region
    _
  $region5: #{model_forward.1} parent=0 // pred_fallthru
    _
  // Predicated region
  $region6: #{model_forward.1} parent=0 // pred_check
    _
  $region7: #{model_forward.1} parent=0 // pred_check_branch
    %13 = sbr.rel (0) target = $region9
  $region8: #{model_forward.1} parent=0 // pred_region
    _
  $region9: #{model_forward.1} parent=0 // pred_fallthru
    _
  // Predicated region
  $region10: #{model_forward.1} parent=0 // pred_check
    _
  $region11: #{model_forward.1} parent=0 // pred_check_branch
    %15 = sbr.rel (0) target = $region13
  $region12: #{model_forward.1} parent=0 // pred_region
    _
  $region13: #{model_forward.1} parent=0 // pred_fallthru
    _
  // Predicated region
  $region14: #{model_forward.1} parent=0 // pred_check
    _
  $region15: #{model_forward.1} parent=0 // pred_check_branch
    %17 = sbr.rel (0) target = $region17
  $region16: #{model_forward.1} parent=0 // pred_region
    _
  $region17: #{model_forward.1} parent=0 // pred_fallthru
    _
  // Predicated region
  $region18: #{model_forward.1} parent=0 // pred_check
    _
  $region19: #{model_forward.1} parent=0 // pred_check_branch
    %19 = sbr.rel (0) target = $region21
  $region20: #{model_forward.1} parent=0 // pred_region
    _
  $region21: #{model_forward.1} parent=0 // pred_fallthru
    _
  %v20 = vld [vmem:[%s2] sm:$0xff]
  %v21 = vld [vmem:[%s2 + $0x8] sm:$0xff]
  %v22 = vld [vmem:[%s0] sm:$0xff]
  %v23 = vld [vmem:[%s0 + $0x8] sm:$0xff]
  %v24 = vld [vmem:[%s0 + $0x10] sm:$0xff]
  %v25 = vld [vmem:[%s0 + $0x18] sm:$0xff]
  %v26 = vld [vmem:[%s0 + $0x20] sm:$0xff]
  %v27 = vld [vmem:[%s0 + $0x28] sm:$0xff]
  %v28 = vld [vmem:[%s0 + $0x30] sm:$0xff]
  %v29 = vld [vmem:[%s0 + $0x38] sm:$0xff]
  %v30 = vld [vmem:[%s0 + $0x40] sm:$0xff]
  %v31 = vld [vmem:[%s0 + $0x48] sm:$0xff]
  %v32 = vld [vmem:[%s0 + $0x50] sm:$0x1]
  %v33 = vld [vmem:[%s0 + $0x58] sm:$0x1]
  %v34 = vld [vmem:[%s0 + $0x60] sm:$0x1]
  %v35 = vld [vmem:[%s0 + $0x68] sm:$0x1]
  %v36 = vld [vmem:[%s0 + $0x70] sm:$0x1]
  %v37 = vld [vmem:[%s0 + $0x78] sm:$0x1]
  %v38 = vld [vmem:[%s0 + $0x80] sm:$0x1]
  %v39 = vld [vmem:[%s0 + $0x88] sm:$0x1]
  %v40 = vld [vmem:[%s0 + $0x90] sm:$0x1]
  %v41 = vld [vmem:[%s0 + $0x98] sm:$0x1]
  %v42 = vld [vmem:[%s3] sm:$0xff]
  %v43 = vld [vmem:[%s3 + $0x8] sm:$0xff]
  %45 = vset.pattern.permute.xlu0 0
  %46 = vperm.xlu0 %45, %v42
  %v47 = vpop.permute.xlu0 %46
  %50 = vset.pattern.permute.xlu0 0
  %51 = vperm.xlu0 %50, %v43
  %v52 = vpop.permute.xlu0 %51
  %vm54 = vcmask 72704
  %v56 = vsel %vm54, %v20, 0
  %v59 = vsel %vm54, %v21, 0
  %vm61 = vcmask 1040384
  %v63 = vsel %vm61, %v32, 0
  %v66 = vsel %vm61, %v33, 0
  %v69 = vsel %vm61, %v34, 0
  %v72 = vsel %vm61, %v35, 0
  %v75 = vsel %vm61, %v36, 0
  %v78 = vsel %vm61, %v37, 0
  %v81 = vsel %vm61, %v38, 0
  %v84 = vsel %vm61, %v39, 0
  %v87 = vsel %vm61, %v40, 0
  %v90 = vsel %vm61, %v41, 0
  %92 = vmatprep.subr.mxu0 %v23
  %93 = vmatpush1.msra.mxu0 %v22
  %94 = vmatprep.subr.mxu0 %v66
  %95 = vmatpush1.msra.mxu0 %v63
  %96 = vmatprep.subr.mxu0 0.0
  %97 = vmatpush1.msra.mxu0 0.0
  %98 = vmatprep.subr.mxu0 0.0
  %99 = vmatpush1.msra.mxu0 0.0
  %100 = vmatprep.subr.mxu0 0.0
  %101 = vmatpush1.msra.mxu0 0.0
  %102 = vmatprep.subr.mxu0 0.0
  %103 = vmatpush1.msra.mxu0 0.0
  %104 = vmatprep.subr.mxu0 0.0
  %105 = vmatpush1.msra.mxu0 0.0
  %106 = vmatprep.subr.mxu0 0.0
  %107 = vmatpush1.msra.mxu0 0.0
  %108 = vmatprep.subr.mxu0 0.0
  %109 = vmatpush1.msra.mxu0 0.0
  %110 = vmatprep.subr.mxu0 0.0
  %111 = vmatpush1.msra.mxu0 0.0
  %112 = vmatprep.subr.mxu0 0.0
  %113 = vmatpush1.msra.mxu0 0.0
  %114 = vmatprep.subr.mxu0 0.0
  %115 = vmatpush1.msra.mxu0 0.0
  %116 = vmatprep.subr.mxu0 0.0
  %117 = vmatpush1.msra.mxu0 0.0
  %118 = vmatprep.subr.mxu0 0.0
  %119 = vmatpush1.msra.mxu0 0.0
  %120 = vmatprep.subr.mxu0 0.0
  %121 = vmatpush1.msra.mxu0 0.0
  %122 = vmatprep.subr.mxu0 0.0
  %123 = vmatpush1.msra.mxu0 0.0
  %124 = vmatprep.subr.mxu0 0.0
  %125 = vmatpush1.msra.mxu0 0.0
  %126 = vmatprep.subr.mxu0 0.0
  %127 = vmatpush1.msra.mxu0 0.0
  %128 = vmatprep.subr.mxu0 0.0
  %129 = vmatpush1.msra.mxu0 0.0
  %130 = vmatprep.subr.mxu0 0.0
  %131 = vmatpush1.msra.mxu0 0.0
  %132 = vmatprep.subr.mxu0 0.0
  %133 = vmatpush1.msra.mxu0 0.0
  %134 = vmatprep.subr.mxu0 0.0
  %135 = vmatpush1.msra.mxu0 0.0
  %136 = vmatprep.subr.mxu0 0.0
  %137 = vmatpush1.msra.mxu0 0.0
  %138 = vmatprep.subr.mxu0 0.0
  %139 = vmatpush1.msra.mxu0 0.0
  %140 = vmatprep.subr.mxu0 0.0
  %141 = vmatpush1.msra.mxu0 0.0
  %142 = vmatprep.subr.mxu0 0.0
  %143 = vmatpush1.msra.mxu0 0.0
  %144 = vmatprep.subr.mxu0 0.0
  %145 = vmatpush1.msra.mxu0 0.0
  %146 = vmatprep.subr.mxu0 0.0
  %147 = vmatpush1.msra.mxu0 0.0
  %148 = vmatprep.subr.mxu0 0.0
  %149 = vmatpush1.msra.mxu0 0.0
  %150 = vmatprep.subr.mxu0 0.0
  %151 = vmatpush1.msra.mxu0 0.0
  %152 = vmatprep.subr.mxu0 0.0
  %153 = vmatpush1.msra.mxu0 0.0
  %154 = vmatprep.subr.mxu0 0.0
  %155 = vmatpush1.msra.mxu0 0.0
  %156 = vmatprep.mubr.f32.mxu0 0.0
  %157 = vmatmul.mubr.f32.gmra.mrb[0].mxu0 %v56
  %v158 = vpop.f32.mrb[0].mxu0
  %v159 = vadd.f32 %v47, %v158
  %v160 = vpop.f32.mrb[0].mxu0
  %v161 = vadd.f32 %v47, %v160
  %162 = vmatprep.mubr.f32.mxu0 0.0
  %163 = vmatmul.mubr.f32.gmra.mrb[0].mxu0 %v59
  %v164 = vpop.f32.mrb[0].mxu0
  %v165 = vadd.f32 %v52, %v164
  %v166 = vpop.f32.mrb[0].mxu0
  %v167 = vadd.f32 %v52, %v166
  %168 = vdwg.mxu0
  %169 = vmatprep.subr.mxu0 %v25
  %170 = vmatpush1.msra.mxu0 %v24
  %171 = vmatprep.subr.mxu0 %v72
  %172 = vmatpush1.msra.mxu0 %v69
  %173 = vmatprep.subr.mxu0 0.0
  %174 = vmatpush1.msra.mxu0 0.0
  %175 = vmatprep.subr.mxu0 0.0
  %176 = vmatpush1.msra.mxu0 0.0
  %177 = vmatprep.subr.mxu0 0.0
  %178 = vmatpush1.msra.mxu0 0.0
  %179 = vmatprep.subr.mxu0 0.0
  %180 = vmatpush1.msra.mxu0 0.0
  %181 = vmatprep.subr.mxu0 0.0
  %182 = vmatpush1.msra.mxu0 0.0
  %183 = vmatprep.subr.mxu0 0.0
  %184 = vmatpush1.msra.mxu0 0.0
  %185 = vmatprep.subr.mxu0 0.0
  %186 = vmatpush1.msra.mxu0 0.0
  %187 = vmatprep.subr.mxu0 0.0
  %188 = vmatpush1.msra.mxu0 0.0
  %189 = vmatprep.subr.mxu0 0.0
  %190 = vmatpush1.msra.mxu0 0.0
  %191 = vmatprep.subr.mxu0 0.0
  %192 = vmatpush1.msra.mxu0 0.0
  %193 = vmatprep.subr.mxu0 0.0
  %194 = vmatpush1.msra.mxu0 0.0
  %195 = vmatprep.subr.mxu0 0.0
  %196 = vmatpush1.msra.mxu0 0.0
  %197 = vmatprep.subr.mxu0 0.0
  %198 = vmatpush1.msra.mxu0 0.0
  %199 = vmatprep.subr.mxu0 0.0
  %200 = vmatpush1.msra.mxu0 0.0
  %201 = vmatprep.subr.mxu0 0.0
  %202 = vmatpush1.msra.mxu0 0.0
  %203 = vmatprep.subr.mxu0 0.0
  %204 = vmatpush1.msra.mxu0 0.0
  %205 = vmatprep.subr.mxu0 0.0
  %206 = vmatpush1.msra.mxu0 0.0
  %207 = vmatprep.subr.mxu0 0.0
  %208 = vmatpush1.msra.mxu0 0.0
  %209 = vmatprep.subr.mxu0 0.0
  %210 = vmatpush1.msra.mxu0 0.0
  %211 = vmatprep.subr.mxu0 0.0
  %212 = vmatpush1.msra.mxu0 0.0
  %213 = vmatprep.subr.mxu0 0.0
  %214 = vmatpush1.msra.mxu0 0.0
  %215 = vmatprep.subr.mxu0 0.0
  %216 = vmatpush1.msra.mxu0 0.0
  %217 = vmatprep.subr.mxu0 0.0
  %218 = vmatpush1.msra.mxu0 0.0
  %219 = vmatprep.subr.mxu0 0.0
  %220 = vmatpush1.msra.mxu0 0.0
  %221 = vmatprep.subr.mxu0 0.0
  %222 = vmatpush1.msra.mxu0 0.0
  %223 = vmatprep.subr.mxu0 0.0
  %224 = vmatpush1.msra.mxu0 0.0
  %225 = vmatprep.subr.mxu0 0.0
  %226 = vmatpush1.msra.mxu0 0.0
  %227 = vmatprep.subr.mxu0 0.0
  %228 = vmatpush1.msra.mxu0 0.0
  %229 = vmatprep.subr.mxu0 0.0
  %230 = vmatpush1.msra.mxu0 0.0
  %231 = vmatprep.subr.mxu0 0.0
  %232 = vmatpush1.msra.mxu0 0.0
  %233 = vmatprep.mubr.f32.mxu0 0.0
  %234 = vmatmul.mubr.f32.gmra.mrb[0].mxu0 %v56
  %v235 = vpop.f32.mrb[0].mxu0
  %v236 = vadd.f32 %v47, %v235
  %v237 = vpop.f32.mrb[0].mxu0
  %v238 = vadd.f32 %v47, %v237
  %239 = vmatprep.mubr.f32.mxu0 0.0
  %240 = vmatmul.mubr.f32.gmra.mrb[0].mxu0 %v59
  %v241 = vpop.f32.mrb[0].mxu0
  %v242 = vadd.f32 %v52, %v241
  %v243 = vpop.f32.mrb[0].mxu0
  %v244 = vadd.f32 %v52, %v243
  %245 = vdwg.mxu0
  %246 = vmatprep.subr.mxu0 %v27
  %247 = vmatpush1.msra.mxu0 %v26
  %248 = vmatprep.subr.mxu0 %v78
  %249 = vmatpush1.msra.mxu0 %v75
  %250 = vmatprep.subr.mxu0 0.0
  %251 = vmatpush1.msra.mxu0 0.0
  %252 = vmatprep.subr.mxu0 0.0
  %253 = vmatpush1.msra.mxu0 0.0
  %254 = vmatprep.subr.mxu0 0.0
  %255 = vmatpush1.msra.mxu0 0.0
  %256 = vmatprep.subr.mxu0 0.0
  %257 = vmatpush1.msra.mxu0 0.0
  %258 = vmatprep.subr.mxu0 0.0
  %259 = vmatpush1.msra.mxu0 0.0
  %260 = vmatprep.subr.mxu0 0.0
  %261 = vmatpush1.msra.mxu0 0.0
  %262 = vmatprep.subr.mxu0 0.0
  %263 = vmatpush1.msra.mxu0 0.0
  %264 = vmatprep.subr.mxu0 0.0
  %265 = vmatpush1.msra.mxu0 0.0
  %266 = vmatprep.subr.mxu0 0.0
  %267 = vmatpush1.msra.mxu0 0.0
  %268 = vmatprep.subr.mxu0 0.0
  %269 = vmatpush1.msra.mxu0 0.0
  %270 = vmatprep.subr.mxu0 0.0
  %271 = vmatpush1.msra.mxu0 0.0
  %272 = vmatprep.subr.mxu0 0.0
  %273 = vmatpush1.msra.mxu0 0.0
  %274 = vmatprep.subr.mxu0 0.0
  %275 = vmatpush1.msra.mxu0 0.0
  %276 = vmatprep.subr.mxu0 0.0
  %277 = vmatpush1.msra.mxu0 0.0
  %278 = vmatprep.subr.mxu0 0.0
  %279 = vmatpush1.msra.mxu0 0.0
  %280 = vmatprep.subr.mxu0 0.0
  %281 = vmatpush1.msra.mxu0 0.0
  %282 = vmatprep.subr.mxu0 0.0
  %283 = vmatpush1.msra.mxu0 0.0
  %284 = vmatprep.subr.mxu0 0.0
  %285 = vmatpush1.msra.mxu0 0.0
  %286 = vmatprep.subr.mxu0 0.0
  %287 = vmatpush1.msra.mxu0 0.0
  %288 = vmatprep.subr.mxu0 0.0
  %289 = vmatpush1.msra.mxu0 0.0
  %290 = vmatprep.subr.mxu0 0.0
  %291 = vmatpush1.msra.mxu0 0.0
  %292 = vmatprep.subr.mxu0 0.0
  %293 = vmatpush1.msra.mxu0 0.0
  %294 = vmatprep.subr.mxu0 0.0
  %295 = vmatpush1.msra.mxu0 0.0
  %296 = vmatprep.subr.mxu0 0.0
  %297 = vmatpush1.msra.mxu0 0.0
  %298 = vmatprep.subr.mxu0 0.0
  %299 = vmatpush1.msra.mxu0 0.0
  %300 = vmatprep.subr.mxu0 0.0
  %301 = vmatpush1.msra.mxu0 0.0
  %302 = vmatprep.subr.mxu0 0.0
  %303 = vmatpush1.msra.mxu0 0.0
  %304 = vmatprep.subr.mxu0 0.0
  %305 = vmatpush1.msra.mxu0 0.0
  %306 = vmatprep.subr.mxu0 0.0
  %307 = vmatpush1.msra.mxu0 0.0
  %308 = vmatprep.subr.mxu0 0.0
  %309 = vmatpush1.msra.mxu0 0.0
  %310 = vmatprep.mubr.f32.mxu0 0.0
  %311 = vmatmul.mubr.f32.gmra.mrb[0].mxu0 %v56
  %v312 = vpop.f32.mrb[0].mxu0
  %v313 = vadd.f32 %v47, %v312
  %v314 = vpop.f32.mrb[0].mxu0
  %v315 = vadd.f32 %v47, %v314
  %316 = vmatprep.mubr.f32.mxu0 0.0
  %317 = vmatmul.mubr.f32.gmra.mrb[0].mxu0 %v59
  %v318 = vpop.f32.mrb[0].mxu0
  %v319 = vadd.f32 %v52, %v318
  %v320 = vpop.f32.mrb[0].mxu0
  %v321 = vadd.f32 %v52, %v320
  %322 = vdwg.mxu0
  %323 = vmatprep.subr.mxu0 %v29
  %324 = vmatpush1.msra.mxu0 %v28
  %325 = vmatprep.subr.mxu0 %v84
  %326 = vmatpush1.msra.mxu0 %v81
  %327 = vmatprep.subr.mxu0 0.0
  %328 = vmatpush1.msra.mxu0 0.0
  %329 = vmatprep.subr.mxu0 0.0
  %330 = vmatpush1.msra.mxu0 0.0
  %331 = vmatprep.subr.mxu0 0.0
  %332 = vmatpush1.msra.mxu0 0.0
  %333 = vmatprep.subr.mxu0 0.0
  %334 = vmatpush1.msra.mxu0 0.0
  %335 = vmatprep.subr.mxu0 0.0
  %336 = vmatpush1.msra.mxu0 0.0
  %337 = vmatprep.subr.mxu0 0.0
  %338 = vmatpush1.msra.mxu0 0.0
  %339 = vmatprep.subr.mxu0 0.0
  %340 = vmatpush1.msra.mxu0 0.0
  %341 = vmatprep.subr.mxu0 0.0
  %342 = vmatpush1.msra.mxu0 0.0
  %343 = vmatprep.subr.mxu0 0.0
  %344 = vmatpush1.msra.mxu0 0.0
  %345 = vmatprep.subr.mxu0 0.0
  %346 = vmatpush1.msra.mxu0 0.0
  %347 = vmatprep.subr.mxu0 0.0
  %348 = vmatpush1.msra.mxu0 0.0
  %349 = vmatprep.subr.mxu0 0.0
  %350 = vmatpush1.msra.mxu0 0.0
  %351 = vmatprep.subr.mxu0 0.0
  %352 = vmatpush1.msra.mxu0 0.0
  %353 = vmatprep.subr.mxu0 0.0
  %354 = vmatpush1.msra.mxu0 0.0
  %355 = vmatprep.subr.mxu0 0.0
  %356 = vmatpush1.msra.mxu0 0.0
  %357 = vmatprep.subr.mxu0 0.0
  %358 = vmatpush1.msra.mxu0 0.0
  %359 = vmatprep.subr.mxu0 0.0
  %360 = vmatpush1.msra.mxu0 0.0
  %361 = vmatprep.subr.mxu0 0.0
  %362 = vmatpush1.msra.mxu0 0.0
  %363 = vmatprep.subr.mxu0 0.0
  %364 = vmatpush1.msra.mxu0 0.0
  %365 = vmatprep.subr.mxu0 0.0
  %366 = vmatpush1.msra.mxu0 0.0
  %367 = vmatprep.subr.mxu0 0.0
  %368 = vmatpush1.msra.mxu0 0.0
  %369 = vmatprep.subr.mxu0 0.0
  %370 = vmatpush1.msra.mxu0 0.0
  %371 = vmatprep.subr.mxu0 0.0
  %372 = vmatpush1.msra.mxu0 0.0
  %373 = vmatprep.subr.mxu0 0.0
  %374 = vmatpush1.msra.mxu0 0.0
  %375 = vmatprep.subr.mxu0 0.0
  %376 = vmatpush1.msra.mxu0 0.0
  %377 = vmatprep.subr.mxu0 0.0
  %378 = vmatpush1.msra.mxu0 0.0
  %379 = vmatprep.subr.mxu0 0.0
  %380 = vmatpush1.msra.mxu0 0.0
  %381 = vmatprep.subr.mxu0 0.0
  %382 = vmatpush1.msra.mxu0 0.0
  %383 = vmatprep.subr.mxu0 0.0
  %384 = vmatpush1.msra.mxu0 0.0
  %385 = vmatprep.subr.mxu0 0.0
  %386 = vmatpush1.msra.mxu0 0.0
  %387 = vmatprep.mubr.f32.mxu0 0.0
  %388 = vmatmul.mubr.f32.gmra.mrb[0].mxu0 %v56
  %v389 = vpop.f32.mrb[0].mxu0
  %v390 = vadd.f32 %v47, %v389
  %v391 = vpop.f32.mrb[0].mxu0
  %v392 = vadd.f32 %v47, %v391
  %393 = vmatprep.mubr.f32.mxu0 0.0
  %394 = vmatmul.mubr.f32.gmra.mrb[0].mxu0 %v59
  %v395 = vpop.f32.mrb[0].mxu0
  %v396 = vadd.f32 %v52, %v395
  %v397 = vpop.f32.mrb[0].mxu0
  %v398 = vadd.f32 %v52, %v397
  %399 = vdwg.mxu0
  %400 = vmatprep.subr.mxu0 %v31
  %401 = vmatpush1.msra.mxu0 %v30
  %402 = vmatprep.subr.mxu0 %v90
  %403 = vmatpush1.msra.mxu0 %v87
  %404 = vmatprep.subr.mxu0 0.0
  %405 = vmatpush1.msra.mxu0 0.0
  %406 = vmatprep.subr.mxu0 0.0
  %407 = vmatpush1.msra.mxu0 0.0
  %408 = vmatprep.subr.mxu0 0.0
  %409 = vmatpush1.msra.mxu0 0.0
  %410 = vmatprep.subr.mxu0 0.0
  %411 = vmatpush1.msra.mxu0 0.0
  %412 = vmatprep.subr.mxu0 0.0
  %413 = vmatpush1.msra.mxu0 0.0
  %414 = vmatprep.subr.mxu0 0.0
  %415 = vmatpush1.msra.mxu0 0.0
  %416 = vmatprep.subr.mxu0 0.0
  %417 = vmatpush1.msra.mxu0 0.0
  %418 = vmatprep.subr.mxu0 0.0
  %419 = vmatpush1.msra.mxu0 0.0
  %420 = vmatprep.subr.mxu0 0.0
  %421 = vmatpush1.msra.mxu0 0.0
  %422 = vmatprep.subr.mxu0 0.0
  %423 = vmatpush1.msra.mxu0 0.0
  %424 = vmatprep.subr.mxu0 0.0
  %425 = vmatpush1.msra.mxu0 0.0
  %426 = vmatprep.subr.mxu0 0.0
  %427 = vmatpush1.msra.mxu0 0.0
  %428 = vmatprep.subr.mxu0 0.0
  %429 = vmatpush1.msra.mxu0 0.0
  %430 = vmatprep.subr.mxu0 0.0
  %431 = vmatpush1.msra.mxu0 0.0
  %432 = vmatprep.subr.mxu0 0.0
  %433 = vmatpush1.msra.mxu0 0.0
  %434 = vmatprep.subr.mxu0 0.0
  %435 = vmatpush1.msra.mxu0 0.0
  %436 = vmatprep.subr.mxu0 0.0
  %437 = vmatpush1.msra.mxu0 0.0
  %438 = vmatprep.subr.mxu0 0.0
  %439 = vmatpush1.msra.mxu0 0.0
  %440 = vmatprep.subr.mxu0 0.0
  %441 = vmatpush1.msra.mxu0 0.0
  %442 = vmatprep.subr.mxu0 0.0
  %443 = vmatpush1.msra.mxu0 0.0
  %444 = vmatprep.subr.mxu0 0.0
  %445 = vmatpush1.msra.mxu0 0.0
  %446 = vmatprep.subr.mxu0 0.0
  %447 = vmatpush1.msra.mxu0 0.0
  %448 = vmatprep.subr.mxu0 0.0
  %449 = vmatpush1.msra.mxu0 0.0
  %450 = vmatprep.subr.mxu0 0.0
  %451 = vmatpush1.msra.mxu0 0.0
  %452 = vmatprep.subr.mxu0 0.0
  %453 = vmatpush1.msra.mxu0 0.0
  %454 = vmatprep.subr.mxu0 0.0
  %455 = vmatpush1.msra.mxu0 0.0
  %456 = vmatprep.subr.mxu0 0.0
  %457 = vmatpush1.msra.mxu0 0.0
  %458 = vmatprep.subr.mxu0 0.0
  %459 = vmatpush1.msra.mxu0 0.0
  %460 = vmatprep.subr.mxu0 0.0
  %461 = vmatpush1.msra.mxu0 0.0
  %462 = vmatprep.subr.mxu0 0.0
  %463 = vmatpush1.msra.mxu0 0.0
  %464 = vmatprep.mubr.f32.mxu0 0.0
  %465 = vmatmul.mubr.f32.gmra.mrb[0].mxu0 %v56
  %v466 = vpop.f32.mrb[0].mxu0
  %v467 = vadd.f32 %v47, %v466
  %v468 = vpop.f32.mrb[0].mxu0
  %v469 = vadd.f32 %v47, %v468
  %470 = vmatprep.mubr.f32.mxu0 0.0
  %471 = vmatmul.mubr.f32.gmra.mrb[0].mxu0 %v59
  %v472 = vpop.f32.mrb[0].mxu0
  %v473 = vadd.f32 %v52, %v472
  %v474 = vpop.f32.mrb[0].mxu0
  %v475 = vadd.f32 %v52, %v474
  %476 = vdwg.mxu0
  %v477 = vxor.u32 %v159, 2147483648
  %v478 = vxor.u32 %v161, 2147483648
  %v479 = vxor.u32 %v236, 2147483648
  %v480 = vxor.u32 %v238, 2147483648
  %v481 = vxor.u32 %v313, 2147483648
  %v482 = vxor.u32 %v315, 2147483648
  %v483 = vxor.u32 %v390, 2147483648
  %v484 = vxor.u32 %v392, 2147483648
  %v485 = vxor.u32 %v467, 2147483648
  %v486 = vxor.u32 %v469, 2147483648
  %v487 = vxor.u32 %v165, 2147483648
  %v488 = vxor.u32 %v167, 2147483648
  %v489 = vxor.u32 %v242, 2147483648
  %v490 = vxor.u32 %v244, 2147483648
  %v491 = vxor.u32 %v319, 2147483648
  %v492 = vxor.u32 %v321, 2147483648
  %v493 = vxor.u32 %v396, 2147483648
  %v494 = vxor.u32 %v398, 2147483648
  %v495 = vxor.u32 %v473, 2147483648
  %v496 = vxor.u32 %v475, 2147483648
  %v497 = vmul.f32 %v477, 1.442695
  %v498 = vpow.pop %v497
  %v499 = vmul.f32 %v478, 1.442695
  %v500 = vpow.pop %v499
  %v501 = vmul.f32 %v479, 1.442695
  %v502 = vpow.pop %v501
  %v503 = vmul.f32 %v480, 1.442695
  %v504 = vpow.pop %v503
  %v505 = vmul.f32 %v481, 1.442695
  %v506 = vpow.pop %v505
  %v507 = vmul.f32 %v482, 1.442695
  %v508 = vpow.pop %v507
  %v509 = vmul.f32 %v483, 1.442695
  %v510 = vpow.pop %v509
  %v511 = vmul.f32 %v484, 1.442695
  %v512 = vpow.pop %v511
  %v513 = vmul.f32 %v485, 1.442695
  %v514 = vpow.pop %v513
  %v515 = vmul.f32 %v486, 1.442695
  %v516 = vpow.pop %v515
  %v517 = vmul.f32 %v487, 1.442695
  %v518 = vpow.pop %v517
  %v519 = vmul.f32 %v488, 1.442695
  %v520 = vpow.pop %v519
  %v521 = vmul.f32 %v489, 1.442695
  %v522 = vpow.pop %v521
  %v523 = vmul.f32 %v490, 1.442695
  %v524 = vpow.pop %v523
  %v525 = vmul.f32 %v491, 1.442695
  %v526 = vpow.pop %v525
  %v527 = vmul.f32 %v492, 1.442695
  %v528 = vpow.pop %v527
  %v529 = vmul.f32 %v493, 1.442695
  %v530 = vpow.pop %v529
  %v531 = vmul.f32 %v494, 1.442695
  %v532 = vpow.pop %v531
  %v533 = vmul.f32 %v495, 1.442695
  %v534 = vpow.pop %v533
  %v535 = vmul.f32 %v496, 1.442695
  %v536 = vpow.pop %v535
  %v537 = vadd.f32 %v498, 1.0
  %v538 = vadd.f32 %v500, 1.0
  %v539 = vadd.f32 %v502, 1.0
  %v540 = vadd.f32 %v504, 1.0
  %v541 = vadd.f32 %v506, 1.0
  %v542 = vadd.f32 %v508, 1.0
  %v543 = vadd.f32 %v510, 1.0
  %v544 = vadd.f32 %v512, 1.0
  %v545 = vadd.f32 %v514, 1.0
  %v546 = vadd.f32 %v516, 1.0
  %v547 = vadd.f32 %v518, 1.0
  %v548 = vadd.f32 %v520, 1.0
  %v549 = vadd.f32 %v522, 1.0
  %v550 = vadd.f32 %v524, 1.0
  %v551 = vadd.f32 %v526, 1.0
  %v552 = vadd.f32 %v528, 1.0
  %v553 = vadd.f32 %v530, 1.0
  %v554 = vadd.f32 %v532, 1.0
  %v555 = vadd.f32 %v534, 1.0
  %v556 = vadd.f32 %v536, 1.0
  %v557 = vrcp.pop %v537
  %v558 = vmul.f32 1.0, %v557
  %v559 = vrcp.pop %v538
  %v560 = vmul.f32 1.0, %v559
  %v561 = vrcp.pop %v539
  %v562 = vmul.f32 1.0, %v561
  %v563 = vrcp.pop %v540
  %v564 = vmul.f32 1.0, %v563
  %v565 = vrcp.pop %v541
  %v566 = vmul.f32 1.0, %v565
  %v567 = vrcp.pop %v542
  %v568 = vmul.f32 1.0, %v567
  %v569 = vrcp.pop %v543
  %v570 = vmul.f32 1.0, %v569
  %v571 = vrcp.pop %v544
  %v572 = vmul.f32 1.0, %v571
  %v573 = vrcp.pop %v545
  %v574 = vmul.f32 1.0, %v573
  %v575 = vrcp.pop %v546
  %v576 = vmul.f32 1.0, %v575
  %v577 = vrcp.pop %v547
  %v578 = vmul.f32 1.0, %v577
  %v579 = vrcp.pop %v548
  %v580 = vmul.f32 1.0, %v579
  %v581 = vrcp.pop %v549
  %v582 = vmul.f32 1.0, %v581
  %v583 = vrcp.pop %v550
  %v584 = vmul.f32 1.0, %v583
  %v585 = vrcp.pop %v551
  %v586 = vmul.f32 1.0, %v585
  %v587 = vrcp.pop %v552
  %v588 = vmul.f32 1.0, %v587
  %v589 = vrcp.pop %v553
  %v590 = vmul.f32 1.0, %v589
  %v591 = vrcp.pop %v554
  %v592 = vmul.f32 1.0, %v591
  %v593 = vrcp.pop %v555
  %v594 = vmul.f32 1.0, %v593
  %v595 = vrcp.pop %v556
  %v596 = vmul.f32 1.0, %v595
  %v597 = vld [vmem:[%s1] sm:$0xff]
  %v598 = vld [vmem:[%s1 + $0x8] sm:$0x3]
  %v601 = vlaneseq
  %v602 = vshrl.u32 %v601, 7
  %v603 = vsub.s32 0, %v602
  %v604 = vrot.slane %v597, %v603
  %v605 = vlaneseq
  %v606 = vshrl.u32 %v605, 7
  %v607 = vsub.s32 1, %v606
  %v608 = vrot.slane %v597, %v607
  %v609 = vlaneseq
  %v610 = vshrl.u32 %v609, 7
  %v611 = vsub.s32 2, %v610
  %v612 = vrot.slane %v597, %v611
  %v613 = vlaneseq
  %v614 = vshrl.u32 %v613, 7
  %v615 = vsub.s32 3, %v614
  %v616 = vrot.slane %v597, %v615
  %v617 = vlaneseq
  %v618 = vshrl.u32 %v617, 7
  %v619 = vsub.s32 4, %v618
  %v620 = vrot.slane %v597, %v619
  %v621 = vlaneseq
  %v622 = vshrl.u32 %v621, 7
  %v623 = vsub.s32 5, %v622
  %v624 = vrot.slane %v597, %v623
  %v625 = vlaneseq
  %v626 = vshrl.u32 %v625, 7
  %v627 = vsub.s32 6, %v626
  %v628 = vrot.slane %v597, %v627
  %v629 = vlaneseq
  %v630 = vshrl.u32 %v629, 7
  %v631 = vsub.s32 7, %v630
  %v632 = vrot.slane %v597, %v631
  %v633 = vlaneseq
  %v634 = vshrl.u32 %v633, 7
  %v635 = vsub.s32 0, %v634
  %v636 = vrot.slane %v598, %v635
  %v637 = vlaneseq
  %v638 = vshrl.u32 %v637, 7
  %v639 = vsub.s32 1, %v638
  %v640 = vrot.slane %v598, %v639
  %v651 = vmul.f32 %v558, %v604
  %v652 = vmul.f32 %v560, %v608
  %v653 = vmul.f32 %v562, %v612
  %v654 = vmul.f32 %v564, %v616
  %v655 = vmul.f32 %v566, %v620
  %v656 = vmul.f32 %v568, %v624
  %v657 = vmul.f32 %v570, %v628
  %v658 = vmul.f32 %v572, %v632
  %v659 = vmul.f32 %v574, %v636
  %v660 = vmul.f32 %v576, %v640
  %v661 = vmul.f32 %v578, %v604
  %v662 = vmul.f32 %v580, %v608
  %v663 = vmul.f32 %v582, %v612
  %v664 = vmul.f32 %v584, %v616
  %v665 = vmul.f32 %v586, %v620
  %v666 = vmul.f32 %v588, %v624
  %v667 = vmul.f32 %v590, %v628
  %v668 = vmul.f32 %v592, %v632
  %v669 = vmul.f32 %v594, %v636
  %v670 = vmul.f32 %v596, %v640
  %v671 = vld [vmem:[%s4] sm:$0xff]
  %v672 = vld [vmem:[%s4 + $0x8] sm:$0xff]
  %v673 = vld [vmem:[%s4 + $0x10] sm:$0xff]
  %v674 = vld [vmem:[%s4 + $0x18] sm:$0xff]
  %vm675 = vcmask 130048
  %v677 = vsel %vm675, %v671, 0
  %v680 = vsel %vm675, %v672, 0
  %v683 = vsel %vm675, %v673, 0
  %v686 = vsel %vm675, %v674, 0
  %688 = vmatprep.subr.mxu0 %v652
  %689 = vmatpush1.msra.mxu0 %v651
  %690 = vmatprep.subr.mxu0 %v662
  %691 = vmatpush1.msra.mxu0 %v661
  %692 = vmatprep.subr.mxu0 0.0
  %693 = vmatpush1.msra.mxu0 0.0
  %694 = vmatprep.subr.mxu0 0.0
  %695 = vmatpush1.msra.mxu0 0.0
  %696 = vmatprep.subr.mxu0 0.0
  %697 = vmatpush1.msra.mxu0 0.0
  %698 = vmatprep.subr.mxu0 0.0
  %699 = vmatpush1.msra.mxu0 0.0
  %700 = vmatprep.subr.mxu0 0.0
  %701 = vmatpush1.msra.mxu0 0.0
  %702 = vmatprep.subr.mxu0 0.0
  %703 = vmatpush1.msra.mxu0 0.0
  %704 = vmatprep.subr.mxu0 0.0
  %705 = vmatpush1.msra.mxu0 0.0
  %706 = vmatprep.subr.mxu0 0.0
  %707 = vmatpush1.msra.mxu0 0.0
  %708 = vmatprep.subr.mxu0 0.0
  %709 = vmatpush1.msra.mxu0 0.0
  %710 = vmatprep.subr.mxu0 0.0
  %711 = vmatpush1.msra.mxu0 0.0
  %712 = vmatprep.subr.mxu0 0.0
  %713 = vmatpush1.msra.mxu0 0.0
  %714 = vmatprep.subr.mxu0 0.0
  %715 = vmatpush1.msra.mxu0 0.0
  %716 = vmatprep.subr.mxu0 0.0
  %717 = vmatpush1.msra.mxu0 0.0
  %718 = vmatprep.subr.mxu0 0.0
  %719 = vmatpush1.msra.mxu0 0.0
  %720 = vmatprep.subr.mxu0 0.0
  %721 = vmatpush1.msra.mxu0 0.0
  %722 = vmatprep.subr.mxu0 0.0
  %723 = vmatpush1.msra.mxu0 0.0
  %724 = vmatprep.subr.mxu0 0.0
  %725 = vmatpush1.msra.mxu0 0.0
  %726 = vmatprep.subr.mxu0 0.0
  %727 = vmatpush1.msra.mxu0 0.0
  %728 = vmatprep.subr.mxu0 0.0
  %729 = vmatpush1.msra.mxu0 0.0
  %730 = vmatprep.subr.mxu0 0.0
  %731 = vmatpush1.msra.mxu0 0.0
  %732 = vmatprep.subr.mxu0 0.0
  %733 = vmatpush1.msra.mxu0 0.0
  %734 = vmatprep.subr.mxu0 0.0
  %735 = vmatpush1.msra.mxu0 0.0
  %736 = vmatprep.subr.mxu0 0.0
  %737 = vmatpush1.msra.mxu0 0.0
  %738 = vmatprep.subr.mxu0 0.0
  %739 = vmatpush1.msra.mxu0 0.0
  %740 = vmatprep.subr.mxu0 0.0
  %741 = vmatpush1.msra.mxu0 0.0
  %742 = vmatprep.subr.mxu0 0.0
  %743 = vmatpush1.msra.mxu0 0.0
  %744 = vmatprep.subr.mxu0 0.0
  %745 = vmatpush1.msra.mxu0 0.0
  %746 = vmatprep.subr.mxu0 0.0
  %747 = vmatpush1.msra.mxu0 0.0
  %748 = vmatprep.subr.mxu0 0.0
  %749 = vmatpush1.msra.mxu0 0.0
  %750 = vmatprep.subr.mxu0 0.0
  %751 = vmatpush1.msra.mxu0 0.0
  %752 = vmatprep.mubr.f32.mxu0 0.0
  %753 = vmatmul.mubr.f32.gmra.mrb[0].mxu0 %v677
  %v754 = vpop.f32.mrb[0].mxu0
  %v755 = vadd.f32 0.0, %v754
  %v756 = vpop.f32.mrb[0].mxu0
  %v757 = vadd.f32 0.0, %v756
  %758 = vmatprep.mubr.f32.mxu0 0.0
  %759 = vmatmul.mubr.f32.gmra.mrb[0].mxu0 %v680
  %v760 = vpop.f32.mrb[0].mxu0
  %v761 = vadd.f32 0.0, %v760
  %v762 = vpop.f32.mrb[0].mxu0
  %v763 = vadd.f32 0.0, %v762
  %764 = vmatprep.mubr.f32.mxu0 0.0
  %765 = vmatmul.mubr.f32.gmra.mrb[0].mxu0 %v683
  %v766 = vpop.f32.mrb[0].mxu0
  %v767 = vadd.f32 0.0, %v766
  %v768 = vpop.f32.mrb[0].mxu0
  %v769 = vadd.f32 0.0, %v768
  %770 = vmatprep.mubr.f32.mxu0 0.0
  %771 = vmatmul.mubr.f32.gmra.mrb[0].mxu0 %v686
  %v772 = vpop.f32.mrb[0].mxu0
  %v773 = vadd.f32 0.0, %v772
  %v774 = vpop.f32.mrb[0].mxu0
  %v775 = vadd.f32 0.0, %v774
  %776 = vdwg.mxu0
  %777 = vmatprep.subr.mxu0 %v654
  %778 = vmatpush1.msra.mxu0 %v653
  %779 = vmatprep.subr.mxu0 %v664
  %780 = vmatpush1.msra.mxu0 %v663
  %781 = vmatprep.subr.mxu0 0.0
  %782 = vmatpush1.msra.mxu0 0.0
  %783 = vmatprep.subr.mxu0 0.0
  %784 = vmatpush1.msra.mxu0 0.0
  %785 = vmatprep.subr.mxu0 0.0
  %786 = vmatpush1.msra.mxu0 0.0
  %787 = vmatprep.subr.mxu0 0.0
  %788 = vmatpush1.msra.mxu0 0.0
  %789 = vmatprep.subr.mxu0 0.0
  %790 = vmatpush1.msra.mxu0 0.0
  %791 = vmatprep.subr.mxu0 0.0
  %792 = vmatpush1.msra.mxu0 0.0
  %793 = vmatprep.subr.mxu0 0.0
  %794 = vmatpush1.msra.mxu0 0.0
  %795 = vmatprep.subr.mxu0 0.0
  %796 = vmatpush1.msra.mxu0 0.0
  %797 = vmatprep.subr.mxu0 0.0
  %798 = vmatpush1.msra.mxu0 0.0
  %799 = vmatprep.subr.mxu0 0.0
  %800 = vmatpush1.msra.mxu0 0.0
  %801 = vmatprep.subr.mxu0 0.0
  %802 = vmatpush1.msra.mxu0 0.0
  %803 = vmatprep.subr.mxu0 0.0
  %804 = vmatpush1.msra.mxu0 0.0
  %805 = vmatprep.subr.mxu0 0.0
  %806 = vmatpush1.msra.mxu0 0.0
  %807 = vmatprep.subr.mxu0 0.0
  %808 = vmatpush1.msra.mxu0 0.0
  %809 = vmatprep.subr.mxu0 0.0
  %810 = vmatpush1.msra.mxu0 0.0
  %811 = vmatprep.subr.mxu0 0.0
  %812 = vmatpush1.msra.mxu0 0.0
  %813 = vmatprep.subr.mxu0 0.0
  %814 = vmatpush1.msra.mxu0 0.0
  %815 = vmatprep.subr.mxu0 0.0
  %816 = vmatpush1.msra.mxu0 0.0
  %817 = vmatprep.subr.mxu0 0.0
  %818 = vmatpush1.msra.mxu0 0.0
  %819 = vmatprep.subr.mxu0 0.0
  %820 = vmatpush1.msra.mxu0 0.0
  %821 = vmatprep.subr.mxu0 0.0
  %822 = vmatpush1.msra.mxu0 0.0
  %823 = vmatprep.subr.mxu0 0.0
  %824 = vmatpush1.msra.mxu0 0.0
  %825 = vmatprep.subr.mxu0 0.0
  %826 = vmatpush1.msra.mxu0 0.0
  %827 = vmatprep.subr.mxu0 0.0
  %828 = vmatpush1.msra.mxu0 0.0
  %829 = vmatprep.subr.mxu0 0.0
  %830 = vmatpush1.msra.mxu0 0.0
  %831 = vmatprep.subr.mxu0 0.0
  %832 = vmatpush1.msra.mxu0 0.0
  %833 = vmatprep.subr.mxu0 0.0
  %834 = vmatpush1.msra.mxu0 0.0
  %835 = vmatprep.subr.mxu0 0.0
  %836 = vmatpush1.msra.mxu0 0.0
  %837 = vmatprep.subr.mxu0 0.0
  %838 = vmatpush1.msra.mxu0 0.0
  %839 = vmatprep.subr.mxu0 0.0
  %840 = vmatpush1.msra.mxu0 0.0
  %841 = vmatprep.mubr.f32.mxu0 0.0
  %842 = vmatmul.mubr.f32.gmra.mrb[0].mxu0 %v677
  %v843 = vpop.f32.mrb[0].mxu0
  %v844 = vadd.f32 0.0, %v843
  %v845 = vpop.f32.mrb[0].mxu0
  %v846 = vadd.f32 0.0, %v845
  %847 = vmatprep.mubr.f32.mxu0 0.0
  %848 = vmatmul.mubr.f32.gmra.mrb[0].mxu0 %v680
  %v849 = vpop.f32.mrb[0].mxu0
  %v850 = vadd.f32 0.0, %v849
  %v851 = vpop.f32.mrb[0].mxu0
  %v852 = vadd.f32 0.0, %v851
  %853 = vmatprep.mubr.f32.mxu0 0.0
  %854 = vmatmul.mubr.f32.gmra.mrb[0].mxu0 %v683
  %v855 = vpop.f32.mrb[0].mxu0
  %v856 = vadd.f32 0.0, %v855
  %v857 = vpop.f32.mrb[0].mxu0
  %v858 = vadd.f32 0.0, %v857
  %859 = vmatprep.mubr.f32.mxu0 0.0
  %860 = vmatmul.mubr.f32.gmra.mrb[0].mxu0 %v686
  %v861 = vpop.f32.mrb[0].mxu0
  %v862 = vadd.f32 0.0, %v861
  %v863 = vpop.f32.mrb[0].mxu0
  %v864 = vadd.f32 0.0, %v863
  %865 = vdwg.mxu0
  %866 = vmatprep.subr.mxu0 %v656
  %867 = vmatpush1.msra.mxu0 %v655
  %868 = vmatprep.subr.mxu0 %v666
  %869 = vmatpush1.msra.mxu0 %v665
  %870 = vmatprep.subr.mxu0 0.0
  %871 = vmatpush1.msra.mxu0 0.0
  %872 = vmatprep.subr.mxu0 0.0
  %873 = vmatpush1.msra.mxu0 0.0
  %874 = vmatprep.subr.mxu0 0.0
  %875 = vmatpush1.msra.mxu0 0.0
  %876 = vmatprep.subr.mxu0 0.0
  %877 = vmatpush1.msra.mxu0 0.0
  %878 = vmatprep.subr.mxu0 0.0
  %879 = vmatpush1.msra.mxu0 0.0
  %880 = vmatprep.subr.mxu0 0.0
  %881 = vmatpush1.msra.mxu0 0.0
  %882 = vmatprep.subr.mxu0 0.0
  %883 = vmatpush1.msra.mxu0 0.0
  %884 = vmatprep.subr.mxu0 0.0
  %885 = vmatpush1.msra.mxu0 0.0
  %886 = vmatprep.subr.mxu0 0.0
  %887 = vmatpush1.msra.mxu0 0.0
  %888 = vmatprep.subr.mxu0 0.0
  %889 = vmatpush1.msra.mxu0 0.0
  %890 = vmatprep.subr.mxu0 0.0
  %891 = vmatpush1.msra.mxu0 0.0
  %892 = vmatprep.subr.mxu0 0.0
  %893 = vmatpush1.msra.mxu0 0.0
  %894 = vmatprep.subr.mxu0 0.0
  %895 = vmatpush1.msra.mxu0 0.0
  %896 = vmatprep.subr.mxu0 0.0
  %897 = vmatpush1.msra.mxu0 0.0
  %898 = vmatprep.subr.mxu0 0.0
  %899 = vmatpush1.msra.mxu0 0.0
  %900 = vmatprep.subr.mxu0 0.0
  %901 = vmatpush1.msra.mxu0 0.0
  %902 = vmatprep.subr.mxu0 0.0
  %903 = vmatpush1.msra.mxu0 0.0
  %904 = vmatprep.subr.mxu0 0.0
  %905 = vmatpush1.msra.mxu0 0.0
  %906 = vmatprep.subr.mxu0 0.0
  %907 = vmatpush1.msra.mxu0 0.0
  %908 = vmatprep.subr.mxu0 0.0
  %909 = vmatpush1.msra.mxu0 0.0
  %910 = vmatprep.subr.mxu0 0.0
  %911 = vmatpush1.msra.mxu0 0.0
  %912 = vmatprep.subr.mxu0 0.0
  %913 = vmatpush1.msra.mxu0 0.0
  %914 = vmatprep.subr.mxu0 0.0
  %915 = vmatpush1.msra.mxu0 0.0
  %916 = vmatprep.subr.mxu0 0.0
  %917 = vmatpush1.msra.mxu0 0.0
  %918 = vmatprep.subr.mxu0 0.0
  %919 = vmatpush1.msra.mxu0 0.0
  %920 = vmatprep.subr.mxu0 0.0
  %921 = vmatpush1.msra.mxu0 0.0
  %922 = vmatprep.subr.mxu0 0.0
  %923 = vmatpush1.msra.mxu0 0.0
  %924 = vmatprep.subr.mxu0 0.0
  %925 = vmatpush1.msra.mxu0 0.0
  %926 = vmatprep.subr.mxu0 0.0
  %927 = vmatpush1.msra.mxu0 0.0
  %928 = vmatprep.subr.mxu0 0.0
  %929 = vmatpush1.msra.mxu0 0.0
  %930 = vmatprep.mubr.f32.mxu0 0.0
  %931 = vmatmul.mubr.f32.gmra.mrb[0].mxu0 %v677
  %v932 = vpop.f32.mrb[0].mxu0
  %v933 = vadd.f32 0.0, %v932
  %v934 = vpop.f32.mrb[0].mxu0
  %v935 = vadd.f32 0.0, %v934
  %936 = vmatprep.mubr.f32.mxu0 0.0
  %937 = vmatmul.mubr.f32.gmra.mrb[0].mxu0 %v680
  %v938 = vpop.f32.mrb[0].mxu0
  %v939 = vadd.f32 0.0, %v938
  %v940 = vpop.f32.mrb[0].mxu0
  %v941 = vadd.f32 0.0, %v940
  %942 = vmatprep.mubr.f32.mxu0 0.0
  %943 = vmatmul.mubr.f32.gmra.mrb[0].mxu0 %v683
  %v944 = vpop.f32.mrb[0].mxu0
  %v945 = vadd.f32 0.0, %v944
  %v946 = vpop.f32.mrb[0].mxu0
  %v947 = vadd.f32 0.0, %v946
  %948 = vmatprep.mubr.f32.mxu0 0.0
  %949 = vmatmul.mubr.f32.gmra.mrb[0].mxu0 %v686
  %v950 = vpop.f32.mrb[0].mxu0
  %v951 = vadd.f32 0.0, %v950
  %v952 = vpop.f32.mrb[0].mxu0
  %v953 = vadd.f32 0.0, %v952
  %954 = vdwg.mxu0
  %955 = vmatprep.subr.mxu0 %v658
  %956 = vmatpush1.msra.mxu0 %v657
  %957 = vmatprep.subr.mxu0 %v668
  %958 = vmatpush1.msra.mxu0 %v667
  %959 = vmatprep.subr.mxu0 0.0
  %960 = vmatpush1.msra.mxu0 0.0
  %961 = vmatprep.subr.mxu0 0.0
  %962 = vmatpush1.msra.mxu0 0.0
  %963 = vmatprep.subr.mxu0 0.0
  %964 = vmatpush1.msra.mxu0 0.0
  %965 = vmatprep.subr.mxu0 0.0
  %966 = vmatpush1.msra.mxu0 0.0
  %967 = vmatprep.subr.mxu0 0.0
  %968 = vmatpush1.msra.mxu0 0.0
  %969 = vmatprep.subr.mxu0 0.0
  %970 = vmatpush1.msra.mxu0 0.0
  %971 = vmatprep.subr.mxu0 0.0
  %972 = vmatpush1.msra.mxu0 0.0
  %973 = vmatprep.subr.mxu0 0.0
  %974 = vmatpush1.msra.mxu0 0.0
  %975 = vmatprep.subr.mxu0 0.0
  %976 = vmatpush1.msra.mxu0 0.0
  %977 = vmatprep.subr.mxu0 0.0
  %978 = vmatpush1.msra.mxu0 0.0
  %979 = vmatprep.subr.mxu0 0.0
  %980 = vmatpush1.msra.mxu0 0.0
  %981 = vmatprep.subr.mxu0 0.0
  %982 = vmatpush1.msra.mxu0 0.0
  %983 = vmatprep.subr.mxu0 0.0
  %984 = vmatpush1.msra.mxu0 0.0
  %985 = vmatprep.subr.mxu0 0.0
  %986 = vmatpush1.msra.mxu0 0.0
  %987 = vmatprep.subr.mxu0 0.0
  %988 = vmatpush1.msra.mxu0 0.0
  %989 = vmatprep.subr.mxu0 0.0
  %990 = vmatpush1.msra.mxu0 0.0
  %991 = vmatprep.subr.mxu0 0.0
  %992 = vmatpush1.msra.mxu0 0.0
  %993 = vmatprep.subr.mxu0 0.0
  %994 = vmatpush1.msra.mxu0 0.0
  %995 = vmatprep.subr.mxu0 0.0
  %996 = vmatpush1.msra.mxu0 0.0
  %997 = vmatprep.subr.mxu0 0.0
  %998 = vmatpush1.msra.mxu0 0.0
  %999 = vmatprep.subr.mxu0 0.0
  %1000 = vmatpush1.msra.mxu0 0.0
  %1001 = vmatprep.subr.mxu0 0.0
  %1002 = vmatpush1.msra.mxu0 0.0
  %1003 = vmatprep.subr.mxu0 0.0
  %1004 = vmatpush1.msra.mxu0 0.0
  %1005 = vmatprep.subr.mxu0 0.0
  %1006 = vmatpush1.msra.mxu0 0.0
  %1007 = vmatprep.subr.mxu0 0.0
  %1008 = vmatpush1.msra.mxu0 0.0
  %1009 = vmatprep.subr.mxu0 0.0
  %1010 = vmatpush1.msra.mxu0 0.0
  %1011 = vmatprep.subr.mxu0 0.0
  %1012 = vmatpush1.msra.mxu0 0.0
  %1013 = vmatprep.subr.mxu0 0.0
  %1014 = vmatpush1.msra.mxu0 0.0
  %1015 = vmatprep.subr.mxu0 0.0
  %1016 = vmatpush1.msra.mxu0 0.0
  %1017 = vmatprep.subr.mxu0 0.0
  %1018 = vmatpush1.msra.mxu0 0.0
  %1019 = vmatprep.mubr.f32.mxu0 0.0
  %1020 = vmatmul.mubr.f32.gmra.mrb[0].mxu0 %v677
  %v1021 = vpop.f32.mrb[0].mxu0
  %v1022 = vadd.f32 0.0, %v1021
  %v1023 = vpop.f32.mrb[0].mxu0
  %v1024 = vadd.f32 0.0, %v1023
  %1025 = vmatprep.mubr.f32.mxu0 0.0
  %1026 = vmatmul.mubr.f32.gmra.mrb[0].mxu0 %v680
  %v1027 = vpop.f32.mrb[0].mxu0
  %v1028 = vadd.f32 0.0, %v1027
  %v1029 = vpop.f32.mrb[0].mxu0
  %v1030 = vadd.f32 0.0, %v1029
  %1031 = vmatprep.mubr.f32.mxu0 0.0
  %1032 = vmatmul.mubr.f32.gmra.mrb[0].mxu0 %v683
  %v1033 = vpop.f32.mrb[0].mxu0
  %v1034 = vadd.f32 0.0, %v1033
  %v1035 = vpop.f32.mrb[0].mxu0
  %v1036 = vadd.f32 0.0, %v1035
  %1037 = vmatprep.mubr.f32.mxu0 0.0
  %1038 = vmatmul.mubr.f32.gmra.mrb[0].mxu0 %v686
  %v1039 = vpop.f32.mrb[0].mxu0
  %v1040 = vadd.f32 0.0, %v1039
  %v1041 = vpop.f32.mrb[0].mxu0
  %v1042 = vadd.f32 0.0, %v1041
  %1043 = vdwg.mxu0
  %1044 = vmatprep.subr.mxu0 %v660
  %1045 = vmatpush1.msra.mxu0 %v659
  %1046 = vmatprep.subr.mxu0 %v670
  %1047 = vmatpush1.msra.mxu0 %v669
  %1048 = vmatprep.subr.mxu0 0.0
  %1049 = vmatpush1.msra.mxu0 0.0
  %1050 = vmatprep.subr.mxu0 0.0
  %1051 = vmatpush1.msra.mxu0 0.0
  %1052 = vmatprep.subr.mxu0 0.0
  %1053 = vmatpush1.msra.mxu0 0.0
  %1054 = vmatprep.subr.mxu0 0.0
  %1055 = vmatpush1.msra.mxu0 0.0
  %1056 = vmatprep.subr.mxu0 0.0
  %1057 = vmatpush1.msra.mxu0 0.0
  %1058 = vmatprep.subr.mxu0 0.0
  %1059 = vmatpush1.msra.mxu0 0.0
  %1060 = vmatprep.subr.mxu0 0.0
  %1061 = vmatpush1.msra.mxu0 0.0
  %1062 = vmatprep.subr.mxu0 0.0
  %1063 = vmatpush1.msra.mxu0 0.0
  %1064 = vmatprep.subr.mxu0 0.0
  %1065 = vmatpush1.msra.mxu0 0.0
  %1066 = vmatprep.subr.mxu0 0.0
  %1067 = vmatpush1.msra.mxu0 0.0
  %1068 = vmatprep.subr.mxu0 0.0
  %1069 = vmatpush1.msra.mxu0 0.0
  %1070 = vmatprep.subr.mxu0 0.0
  %1071 = vmatpush1.msra.mxu0 0.0
  %1072 = vmatprep.subr.mxu0 0.0
  %1073 = vmatpush1.msra.mxu0 0.0
  %1074 = vmatprep.subr.mxu0 0.0
  %1075 = vmatpush1.msra.mxu0 0.0
  %1076 = vmatprep.subr.mxu0 0.0
  %1077 = vmatpush1.msra.mxu0 0.0
  %1078 = vmatprep.subr.mxu0 0.0
  %1079 = vmatpush1.msra.mxu0 0.0
  %1080 = vmatprep.subr.mxu0 0.0
  %1081 = vmatpush1.msra.mxu0 0.0
  %1082 = vmatprep.subr.mxu0 0.0
  %1083 = vmatpush1.msra.mxu0 0.0
  %1084 = vmatprep.subr.mxu0 0.0
  %1085 = vmatpush1.msra.mxu0 0.0
  %1086 = vmatprep.subr.mxu0 0.0
  %1087 = vmatpush1.msra.mxu0 0.0
  %1088 = vmatprep.subr.mxu0 0.0
  %1089 = vmatpush1.msra.mxu0 0.0
  %1090 = vmatprep.subr.mxu0 0.0
  %1091 = vmatpush1.msra.mxu0 0.0
  %1092 = vmatprep.subr.mxu0 0.0
  %1093 = vmatpush1.msra.mxu0 0.0
  %1094 = vmatprep.subr.mxu0 0.0
  %1095 = vmatpush1.msra.mxu0 0.0
  %1096 = vmatprep.subr.mxu0 0.0
  %1097 = vmatpush1.msra.mxu0 0.0
  %1098 = vmatprep.subr.mxu0 0.0
  %1099 = vmatpush1.msra.mxu0 0.0
  %1100 = vmatprep.subr.mxu0 0.0
  %1101 = vmatpush1.msra.mxu0 0.0
  %1102 = vmatprep.subr.mxu0 0.0
  %1103 = vmatpush1.msra.mxu0 0.0
  %1104 = vmatprep.subr.mxu0 0.0
  %1105 = vmatpush1.msra.mxu0 0.0
  %1106 = vmatprep.subr.mxu0 0.0
  %1107 = vmatpush1.msra.mxu0 0.0
  %1108 = vmatprep.mubr.f32.mxu0 0.0
  %1109 = vmatmul.mubr.f32.gmra.mrb[0].mxu0 %v677
  %v1110 = vpop.f32.mrb[0].mxu0
  %v1111 = vadd.f32 0.0, %v1110
  %v1112 = vpop.f32.mrb[0].mxu0
  %v1113 = vadd.f32 0.0, %v1112
  %1114 = vmatprep.mubr.f32.mxu0 0.0
  %1115 = vmatmul.mubr.f32.gmra.mrb[0].mxu0 %v680
  %v1116 = vpop.f32.mrb[0].mxu0
  %v1117 = vadd.f32 0.0, %v1116
  %v1118 = vpop.f32.mrb[0].mxu0
  %v1119 = vadd.f32 0.0, %v1118
  %1120 = vmatprep.mubr.f32.mxu0 0.0
  %1121 = vmatmul.mubr.f32.gmra.mrb[0].mxu0 %v683
  %v1122 = vpop.f32.mrb[0].mxu0
  %v1123 = vadd.f32 0.0, %v1122
  %v1124 = vpop.f32.mrb[0].mxu0
  %v1125 = vadd.f32 0.0, %v1124
  %1126 = vmatprep.mubr.f32.mxu0 0.0
  %1127 = vmatmul.mubr.f32.gmra.mrb[0].mxu0 %v686
  %v1128 = vpop.f32.mrb[0].mxu0
  %v1129 = vadd.f32 0.0, %v1128
  %v1130 = vpop.f32.mrb[0].mxu0
  %v1131 = vadd.f32 0.0, %v1130
  %1132 = vdwg.mxu0
  %v1133 = vxor.u32 %v755, 2147483648
  %v1134 = vxor.u32 %v757, 2147483648
  %v1135 = vxor.u32 %v844, 2147483648
  %v1136 = vxor.u32 %v846, 2147483648
  %v1137 = vxor.u32 %v933, 2147483648
  %v1138 = vxor.u32 %v935, 2147483648
  %v1139 = vxor.u32 %v1022, 2147483648
  %v1140 = vxor.u32 %v1024, 2147483648
  %v1141 = vxor.u32 %v1111, 2147483648
  %v1142 = vxor.u32 %v1113, 2147483648
  %v1143 = vxor.u32 %v761, 2147483648
  %v1144 = vxor.u32 %v763, 2147483648
  %v1145 = vxor.u32 %v850, 2147483648
  %v1146 = vxor.u32 %v852, 2147483648
  %v1147 = vxor.u32 %v939, 2147483648
  %v1148 = vxor.u32 %v941, 2147483648
  %v1149 = vxor.u32 %v1028, 2147483648
  %v1150 = vxor.u32 %v1030, 2147483648
  %v1151 = vxor.u32 %v1117, 2147483648
  %v1152 = vxor.u32 %v1119, 2147483648
  %v1153 = vxor.u32 %v767, 2147483648
  %v1154 = vxor.u32 %v769, 2147483648
  %v1155 = vxor.u32 %v856, 2147483648
  %v1156 = vxor.u32 %v858, 2147483648
  %v1157 = vxor.u32 %v945, 2147483648
  %v1158 = vxor.u32 %v947, 2147483648
  %v1159 = vxor.u32 %v1034, 2147483648
  %v1160 = vxor.u32 %v1036, 2147483648
  %v1161 = vxor.u32 %v1123, 2147483648
  %v1162 = vxor.u32 %v1125, 2147483648
  %v1163 = vxor.u32 %v773, 2147483648
  %v1164 = vxor.u32 %v775, 2147483648
  %v1165 = vxor.u32 %v862, 2147483648
  %v1166 = vxor.u32 %v864, 2147483648
  %v1167 = vxor.u32 %v951, 2147483648
  %v1168 = vxor.u32 %v953, 2147483648
  %v1169 = vxor.u32 %v1040, 2147483648
  %v1170 = vxor.u32 %v1042, 2147483648
  %v1171 = vxor.u32 %v1129, 2147483648
  %v1172 = vxor.u32 %v1131, 2147483648
  %v1173 = vmul.f32 %v1133, 1.442695
  %v1174 = vpow.pop %v1173
  %v1175 = vmul.f32 %v1134, 1.442695
  %v1176 = vpow.pop %v1175
  %v1177 = vmul.f32 %v1135, 1.442695
  %v1178 = vpow.pop %v1177
  %v1179 = vmul.f32 %v1136, 1.442695
  %v1180 = vpow.pop %v1179
  %v1181 = vmul.f32 %v1137, 1.442695
  %v1182 = vpow.pop %v1181
  %v1183 = vmul.f32 %v1138, 1.442695
  %v1184 = vpow.pop %v1183
  %v1185 = vmul.f32 %v1139, 1.442695
  %v1186 = vpow.pop %v1185
  %v1187 = vmul.f32 %v1140, 1.442695
  %v1188 = vpow.pop %v1187
  %v1189 = vmul.f32 %v1141, 1.442695
  %v1190 = vpow.pop %v1189
  %v1191 = vmul.f32 %v1142, 1.442695
  %v1192 = vpow.pop %v1191
  %v1193 = vmul.f32 %v1143, 1.442695
  %v1194 = vpow.pop %v1193
  %v1195 = vmul.f32 %v1144, 1.442695
  %v1196 = vpow.pop %v1195
  %v1197 = vmul.f32 %v1145, 1.442695
  %v1198 = vpow.pop %v1197
  %v1199 = vmul.f32 %v1146, 1.442695
  %v1200 = vpow.pop %v1199
  %v1201 = vmul.f32 %v1147, 1.442695
  %v1202 = vpow.pop %v1201
  %v1203 = vmul.f32 %v1148, 1.442695
  %v1204 = vpow.pop %v1203
  %v1205 = vmul.f32 %v1149, 1.442695
  %v1206 = vpow.pop %v1205
  %v1207 = vmul.f32 %v1150, 1.442695
  %v1208 = vpow.pop %v1207
  %v1209 = vmul.f32 %v1151, 1.442695
  %v1210 = vpow.pop %v1209
  %v1211 = vmul.f32 %v1152, 1.442695
  %v1212 = vpow.pop %v1211
  %v1213 = vmul.f32 %v1153, 1.442695
  %v1214 = vpow.pop %v1213
  %v1215 = vmul.f32 %v1154, 1.442695
  %v1216 = vpow.pop %v1215
  %v1217 = vmul.f32 %v1155, 1.442695
  %v1218 = vpow.pop %v1217
  %v1219 = vmul.f32 %v1156, 1.442695
  %v1220 = vpow.pop %v1219
  %v1221 = vmul.f32 %v1157, 1.442695
  %v1222 = vpow.pop %v1221
  %v1223 = vmul.f32 %v1158, 1.442695
  %v1224 = vpow.pop %v1223
  %v1225 = vmul.f32 %v1159, 1.442695
  %v1226 = vpow.pop %v1225
  %v1227 = vmul.f32 %v1160, 1.442695
  %v1228 = vpow.pop %v1227
  %v1229 = vmul.f32 %v1161, 1.442695
  %v1230 = vpow.pop %v1229
  %v1231 = vmul.f32 %v1162, 1.442695
  %v1232 = vpow.pop %v1231
  %v1233 = vmul.f32 %v1163, 1.442695
  %v1234 = vpow.pop %v1233
  %v1235 = vmul.f32 %v1164, 1.442695
  %v1236 = vpow.pop %v1235
  %v1237 = vmul.f32 %v1165, 1.442695
  %v1238 = vpow.pop %v1237
  %v1239 = vmul.f32 %v1166, 1.442695
  %v1240 = vpow.pop %v1239
  %v1241 = vmul.f32 %v1167, 1.442695
  %v1242 = vpow.pop %v1241
  %v1243 = vmul.f32 %v1168, 1.442695
  %v1244 = vpow.pop %v1243
  %v1245 = vmul.f32 %v1169, 1.442695
  %v1246 = vpow.pop %v1245
  %v1247 = vmul.f32 %v1170, 1.442695
  %v1248 = vpow.pop %v1247
  %v1249 = vmul.f32 %v1171, 1.442695
  %v1250 = vpow.pop %v1249
  %v1251 = vmul.f32 %v1172, 1.442695
  %v1252 = vpow.pop %v1251
  %v1253 = vadd.f32 %v1174, 1.0
  %v1254 = vadd.f32 %v1176, 1.0
  %v1255 = vadd.f32 %v1178, 1.0
  %v1256 = vadd.f32 %v1180, 1.0
  %v1257 = vadd.f32 %v1182, 1.0
  %v1258 = vadd.f32 %v1184, 1.0
  %v1259 = vadd.f32 %v1186, 1.0
  %v1260 = vadd.f32 %v1188, 1.0
  %v1261 = vadd.f32 %v1190, 1.0
  %v1262 = vadd.f32 %v1192, 1.0
  %v1263 = vadd.f32 %v1194, 1.0
  %v1264 = vadd.f32 %v1196, 1.0
  %v1265 = vadd.f32 %v1198, 1.0
  %v1266 = vadd.f32 %v1200, 1.0
  %v1267 = vadd.f32 %v1202, 1.0
  %v1268 = vadd.f32 %v1204, 1.0
  %v1269 = vadd.f32 %v1206, 1.0
  %v1270 = vadd.f32 %v1208, 1.0
  %v1271 = vadd.f32 %v1210, 1.0
  %v1272 = vadd.f32 %v1212, 1.0
  %v1273 = vadd.f32 %v1214, 1.0
  %v1274 = vadd.f32 %v1216, 1.0
  %v1275 = vadd.f32 %v1218, 1.0
  %v1276 = vadd.f32 %v1220, 1.0
  %v1277 = vadd.f32 %v1222, 1.0
  %v1278 = vadd.f32 %v1224, 1.0
  %v1279 = vadd.f32 %v1226, 1.0
  %v1280 = vadd.f32 %v1228, 1.0
  %v1281 = vadd.f32 %v1230, 1.0
  %v1282 = vadd.f32 %v1232, 1.0
  %v1283 = vadd.f32 %v1234, 1.0
  %v1284 = vadd.f32 %v1236, 1.0
  %v1285 = vadd.f32 %v1238, 1.0
  %v1286 = vadd.f32 %v1240, 1.0
  %v1287 = vadd.f32 %v1242, 1.0
  %v1288 = vadd.f32 %v1244, 1.0
  %v1289 = vadd.f32 %v1246, 1.0
  %v1290 = vadd.f32 %v1248, 1.0
  %v1291 = vadd.f32 %v1250, 1.0
  %v1292 = vadd.f32 %v1252, 1.0
  %v1293 = vrcp.pop %v1253
  %v1294 = vmul.f32 1.0, %v1293
  %v1295 = vrcp.pop %v1254
  %v1296 = vmul.f32 1.0, %v1295
  %v1297 = vrcp.pop %v1255
  %v1298 = vmul.f32 1.0, %v1297
  %v1299 = vrcp.pop %v1256
  %v1300 = vmul.f32 1.0, %v1299
  %v1301 = vrcp.pop %v1257
  %v1302 = vmul.f32 1.0, %v1301
  %v1303 = vrcp.pop %v1258
  %v1304 = vmul.f32 1.0, %v1303
  %v1305 = vrcp.pop %v1259
  %v1306 = vmul.f32 1.0, %v1305
  %v1307 = vrcp.pop %v1260
  %v1308 = vmul.f32 1.0, %v1307
  %v1309 = vrcp.pop %v1261
  %v1310 = vmul.f32 1.0, %v1309
  %v1311 = vrcp.pop %v1262
  %v1312 = vmul.f32 1.0, %v1311
  %v1313 = vrcp.pop %v1263
  %v1314 = vmul.f32 1.0, %v1313
  %v1315 = vrcp.pop %v1264
  %v1316 = vmul.f32 1.0, %v1315
  %v1317 = vrcp.pop %v1265
  %v1318 = vmul.f32 1.0, %v1317
  %v1319 = vrcp.pop %v1266
  %v1320 = vmul.f32 1.0, %v1319
  %v1321 = vrcp.pop %v1267
  %v1322 = vmul.f32 1.0, %v1321
  %v1323 = vrcp.pop %v1268
  %v1324 = vmul.f32 1.0, %v1323
  %v1325 = vrcp.pop %v1269
  %v1326 = vmul.f32 1.0, %v1325
  %v1327 = vrcp.pop %v1270
  %v1328 = vmul.f32 1.0, %v1327
  %v1329 = vrcp.pop %v1271
  %v1330 = vmul.f32 1.0, %v1329
  %v1331 = vrcp.pop %v1272
  %v1332 = vmul.f32 1.0, %v1331
  %v1333 = vrcp.pop %v1273
  %v1334 = vmul.f32 1.0, %v1333
  %v1335 = vrcp.pop %v1274
  %v1336 = vmul.f32 1.0, %v1335
  %v1337 = vrcp.pop %v1275
  %v1338 = vmul.f32 1.0, %v1337
  %v1339 = vrcp.pop %v1276
  %v1340 = vmul.f32 1.0, %v1339
  %v1341 = vrcp.pop %v1277
  %v1342 = vmul.f32 1.0, %v1341
  %v1343 = vrcp.pop %v1278
  %v1344 = vmul.f32 1.0, %v1343
  %v1345 = vrcp.pop %v1279
  %v1346 = vmul.f32 1.0, %v1345
  %v1347 = vrcp.pop %v1280
  %v1348 = vmul.f32 1.0, %v1347
  %v1349 = vrcp.pop %v1281
  %v1350 = vmul.f32 1.0, %v1349
  %v1351 = vrcp.pop %v1282
  %v1352 = vmul.f32 1.0, %v1351
  %v1353 = vrcp.pop %v1283
  %v1354 = vmul.f32 1.0, %v1353
  %v1355 = vrcp.pop %v1284
  %v1356 = vmul.f32 1.0, %v1355
  %v1357 = vrcp.pop %v1285
  %v1358 = vmul.f32 1.0, %v1357
  %v1359 = vrcp.pop %v1286
  %v1360 = vmul.f32 1.0, %v1359
  %v1361 = vrcp.pop %v1287
  %v1362 = vmul.f32 1.0, %v1361
  %v1363 = vrcp.pop %v1288
  %v1364 = vmul.f32 1.0, %v1363
  %v1365 = vrcp.pop %v1289
  %v1366 = vmul.f32 1.0, %v1365
  %v1367 = vrcp.pop %v1290
  %v1368 = vmul.f32 1.0, %v1367
  %v1369 = vrcp.pop %v1291
  %v1370 = vmul.f32 1.0, %v1369
  %v1371 = vrcp.pop %v1292
  %v1372 = vmul.f32 1.0, %v1371
  %1373 = vst [vmem:[%s5] sm:$0xff] %v1294
  %1374 = vst [vmem:[%s5 + $0x8] sm:$0xff] %v1296
  %1375 = vst [vmem:[%s5 + $0x10] sm:$0xff] %v1298
  %1376 = vst [vmem:[%s5 + $0x18] sm:$0xff] %v1300
  %1377 = vst [vmem:[%s5 + $0x20] sm:$0xff] %v1302
  %1378 = vst [vmem:[%s5 + $0x28] sm:$0xff] %v1304
  %1379 = vst [vmem:[%s5 + $0x30] sm:$0xff] %v1306
  %1380 = vst [vmem:[%s5 + $0x38] sm:$0xff] %v1308
  %1381 = vst [vmem:[%s5 + $0x40] sm:$0xff] %v1310
  %vm1382 = vcmask 31744
  %1383 = vst.msk [vmem:[%s5 + $0x48] sm:$0xff] %vm1382, %v1312
  %1384 = vst [vmem:[%s5 + $0x50] sm:$0xff] %v1314
  %1385 = vst [vmem:[%s5 + $0x58] sm:$0xff] %v1316
  %1386 = vst [vmem:[%s5 + $0x60] sm:$0xff] %v1318
  %1387 = vst [vmem:[%s5 + $0x68] sm:$0xff] %v1320
  %1388 = vst [vmem:[%s5 + $0x70] sm:$0xff] %v1322
  %1389 = vst [vmem:[%s5 + $0x78] sm:$0xff] %v1324
  %1390 = vst [vmem:[%s5 + $0x80] sm:$0xff] %v1326
  %1391 = vst [vmem:[%s5 + $0x88] sm:$0xff] %v1328
  %1392 = vst [vmem:[%s5 + $0x90] sm:$0xff] %v1330
  %1393 = vst.msk [vmem:[%s5 + $0x98] sm:$0xff] %vm1382, %v1332
  %1394 = vst [vmem:[%s5 + $0xa0] sm:$0xff] %v1334
  %1395 = vst [vmem:[%s5 + $0xa8] sm:$0xff] %v1336
  %1396 = vst [vmem:[%s5 + $0xb0] sm:$0xff] %v1338
  %1397 = vst [vmem:[%s5 + $0xb8] sm:$0xff] %v1340
  %1398 = vst [vmem:[%s5 + $0xc0] sm:$0xff] %v1342
  %1399 = vst [vmem:[%s5 + $0xc8] sm:$0xff] %v1344
  %1400 = vst [vmem:[%s5 + $0xd0] sm:$0xff] %v1346
  %1401 = vst [vmem:[%s5 + $0xd8] sm:$0xff] %v1348
  %1402 = vst [vmem:[%s5 + $0xe0] sm:$0xff] %v1350
  %1403 = vst.msk [vmem:[%s5 + $0xe8] sm:$0xff] %vm1382, %v1352
  %1404 = vst [vmem:[%s5 + $0xf0] sm:$0xff] %v1354
  %1405 = vst [vmem:[%s5 + $0xf8] sm:$0xff] %v1356
  %1406 = vst [vmem:[%s5 + $0x100] sm:$0xff] %v1358
  %1407 = vst [vmem:[%s5 + $0x108] sm:$0xff] %v1360
  %1408 = vst [vmem:[%s5 + $0x110] sm:$0xff] %v1362
  %1409 = vst [vmem:[%s5 + $0x118] sm:$0xff] %v1364
  %1410 = vst [vmem:[%s5 + $0x120] sm:$0xff] %v1366
  %1411 = vst [vmem:[%s5 + $0x128] sm:$0xff] %v1368
  %1412 = vst [vmem:[%s5 + $0x130] sm:$0xff] %v1370
  %1413 = vst.msk [vmem:[%s5 + $0x138] sm:$0xff] %vm1382, %v1372
  // Predicated region
  $region22: #{model_forward.1} parent=0 // pred_check
    _
  $region23: #{model_forward.1} parent=0 // pred_check_branch
    %1415 = sbr.rel (0) target = $region25
  $region24: #{model_forward.1} parent=0 // pred_region
    _
  $region25: #{model_forward.1} parent=0 // pred_fallthru
    _
  // Predicated region
  $region26: #{model_forward.1} parent=0 // pred_check
    _
  $region27: #{model_forward.1} parent=0 // pred_check_branch
    %1417 = sbr.rel (0) target = $region29
  $region28: #{model_forward.1} parent=0 // pred_region
    _
  $region29: #{model_forward.1} parent=0 // pred_fallthru
    _

</llo_original>
